<compile_context>
chip_gen: v7x
topology: tpu7x:2x2x1
jax: 0.10.0
libtpu: 0.0.40
codegen_flags: <defaults>
</compile_context>

<pallas_src>
import functools

import jax
import jax.numpy as jnp
from jax.experimental import pallas as pl
from jax.experimental.pallas import tpu as pltpu


_SQRT_2_OVER_PI = 0.7978845608028654


def _gelu(x):
    # TODO(synk): torch.nn.GELU() is the exact erf form; tanh approximation is used here
    # (and in the in-script reference) because erf has no guaranteed Mosaic lowering.
    return 0.5 * x * (1.0 + jnp.tanh(_SQRT_2_OVER_PI * (x + 0.044715 * x * x * x)))


# ---------------------------------------------------------------------------
# Fused ViT block kernel: LN1 -> MHSA -> residual -> LN2 -> MLP -> residual
# ---------------------------------------------------------------------------
def _vit_block_kernel(x_ref, g1_ref, b1_ref, wq_ref, bq_ref, wk_ref, bk_ref,
                      wv_ref, bv_ref, wo_ref, bo_ref, g2_ref, b2_ref,
                      wfc1_ref, bfc1_ref, wfc2_ref, bfc2_ref, o_ref):
    H, C, D = wq_ref.shape
    eps = 1e-6

    x = x_ref[0]                                        # (N, C), lane-dense
    N = x.shape[0]

    # ---- LayerNorm 1 (f32) ----
    mu = jnp.mean(x, axis=-1, keepdims=True)
    xc = x - mu
    var = jnp.mean(xc * xc, axis=-1, keepdims=True)
    xn = xc * jax.lax.rsqrt(var + eps) * g1_ref[...] + b1_ref[...]

    # ---- QKV projections with heads on the leading (major) axis ----
    # 1/sqrt(D) is already folded into wq/bq on the host, so no O(N^2) rescale below.
    xh = jnp.broadcast_to(xn, (H, N, C))
    q = jnp.einsum("hnc,hcd->hnd", xh, wq_ref[...],
                   preferred_element_type=jnp.float32) + bq_ref[...]
    k = jnp.einsum("hnc,hcd->hnd", xh, wk_ref[...],
                   preferred_element_type=jnp.float32) + bk_ref[...]
    v = jnp.einsum("hnc,hcd->hnd", xh, wv_ref[...],
                   preferred_element_type=jnp.float32) + bv_ref[...]

    # ---- scaled dot-product attention, batched over heads ----
    # Contraction is on D directly (no materialized k.T); N stays the lane axis.
    s = jnp.einsum("hqd,hkd->hqk", q, k, preferred_element_type=jnp.float32)
    s = s - jnp.max(s, axis=-1, keepdims=True)
    p = jnp.exp(s)
    denom = jnp.sum(p, axis=-1, keepdims=True)
    inv = pl.reciprocal(denom, approx=True)             # EUP slot
    inv = inv * (2.0 - denom * inv)                     # one Newton step -> ~f32 accuracy
    p = p * inv
    o = jnp.einsum("hqk,hkd->hqd", p, v, preferred_element_type=jnp.float32)

    # ---- output projection: per-head partials reduced over the major head axis ----
    attn_out = jnp.sum(
        jnp.einsum("hnd,hdc->hnc", o, wo_ref[...],
                   preferred_element_type=jnp.float32), axis=0) + bo_ref[...]
    x1 = x + attn_out

    # ---- LayerNorm 2 + MLP ----
    mu2 = jnp.mean(x1, axis=-1, keepdims=True)
    xc2 = x1 - mu2
    var2 = jnp.mean(xc2 * xc2, axis=-1, keepdims=True)
    xn2 = xc2 * jax.lax.rsqrt(var2 + eps) * g2_ref[...] + b2_ref[...]

    h1 = jnp.dot(xn2, wfc1_ref[...], preferred_element_type=jnp.float32) + bfc1_ref[...]
    h1 = _gelu(h1)
    h2 = jnp.dot(h1, wfc2_ref[...], preferred_element_type=jnp.float32) + bfc2_ref[...]

    # Single lane-dense store of the whole block output.
    o_ref[0] = (x1 + h2).astype(o_ref.dtype)


@functools.partial(jax.jit, static_argnames=("num_heads",))
def _vit_block_call(x, p, *, num_heads):
    B, N, C = x.shape
    H = num_heads
    assert C % H == 0
    D = C // H
    F = p["w_fc1"].shape[1]
    scale = float(D) ** -0.5

    w_qkv, b_qkv = p["w_qkv"], p["b_qkv"]
    # Head-major weights (layout plumbing, once per call outside the kernel);
    # the attention scale is folded into the Q projection.
    wq = (w_qkv[:, 0 * C:1 * C] * scale).reshape(C, H, D).transpose(1, 0, 2)
    wk = w_qkv[:, 1 * C:2 * C].reshape(C, H, D).transpose(1, 0, 2)
    wv = w_qkv[:, 2 * C:3 * C].reshape(C, H, D).transpose(1, 0, 2)
    bq = (b_qkv[0 * C:1 * C] * scale).reshape(H, 1, D)
    bk = b_qkv[1 * C:2 * C].reshape(H, 1, D)
    bv = b_qkv[2 * C:3 * C].reshape(H, 1, D)
    wo = p["w_proj"].reshape(H, D, C)
    bo = p["b_proj"].reshape(1, C)
    g1 = p["ln1_g"].reshape(1, C)
    be1 = p["ln1_b"].reshape(1, C)
    g2 = p["ln2_g"].reshape(1, C)
    be2 = p["ln2_b"].reshape(1, C)
    wfc1 = p["w_fc1"]
    bfc1 = p["b_fc1"].reshape(1, F)
    wfc2 = p["w_fc2"]
    bfc2 = p["b_fc2"].reshape(1, C)

    flops = 2 * B * (N * C * 3 * C + 2 * H * N * N * D + N * C * C + 2 * N * C * F)
    transcendentals = B * (H * N * N + N * F)
    bytes_accessed = 4 * (2 * B * N * C + 3 * (wq.size + bq.size) + wo.size
                          + wfc1.size + wfc2.size + bfc1.size + bfc2.size + 6 * C)

    return pl.pallas_call(
        _vit_block_kernel,
        out_shape=jax.ShapeDtypeStruct((B, N, C), x.dtype),
        grid=(B,),
        in_specs=[
            pl.BlockSpec((1, N, C), lambda b: (b, 0, 0)),     # x
            pl.BlockSpec((1, C), lambda b: (0, 0)),           # ln1 gamma
            pl.BlockSpec((1, C), lambda b: (0, 0)),           # ln1 beta
            pl.BlockSpec((H, C, D), lambda b: (0, 0, 0)),     # Wq (scaled)
            pl.BlockSpec((H, 1, D), lambda b: (0, 0, 0)),     # bq (scaled)
            pl.BlockSpec((H, C, D), lambda b: (0, 0, 0)),     # Wk
            pl.BlockSpec((H, 1, D), lambda b: (0, 0, 0)),     # bk
            pl.BlockSpec((H, C, D), lambda b: (0, 0, 0)),     # Wv
            pl.BlockSpec((H, 1, D), lambda b: (0, 0, 0)),     # bv
            pl.BlockSpec((H, D, C), lambda b: (0, 0, 0)),     # Wproj (head-major)
            pl.BlockSpec((1, C), lambda b: (0, 0)),           # bproj
            pl.BlockSpec((1, C), lambda b: (0, 0)),           # ln2 gamma
            pl.BlockSpec((1, C), lambda b: (0, 0)),           # ln2 beta
            pl.BlockSpec((C, F), lambda b: (0, 0)),           # Wfc1
            pl.BlockSpec((1, F), lambda b: (0, 0)),           # bfc1
            pl.BlockSpec((F, C), lambda b: (0, 0)),           # Wfc2
            pl.BlockSpec((1, C), lambda b: (0, 0)),           # bfc2
        ],
        out_specs=pl.BlockSpec((1, N, C), lambda b: (b, 0, 0)),
        compiler_params=pltpu.CompilerParams(
            dimension_semantics=("parallel",),
            vmem_limit_bytes=32 * 1024 * 1024),
        cost_estimate=pl.CostEstimate(flops=flops, transcendentals=transcendentals,
                                      bytes_accessed=bytes_accessed),
    )(x, g1, be1, wq, bq, wk, bk, wv, bv, wo, bo, g2, be2, wfc1, bfc1, wfc2, bfc2)


# ---------------------------------------------------------------------------
# Patch embedding (+cls token +pos embed) kernel
# ---------------------------------------------------------------------------
def _embed_kernel(tok_ref, w_ref, bias_ref, o_ref):
    # tok_ref: (1, N, K) where row 0 is a zero row standing in for the cls token;
    # bias_ref: (N, E) with row 0 = cls + pos[0], rows 1.. = conv bias + pos[1..].
    o_ref[0] = (jnp.dot(tok_ref[0], w_ref[...], preferred_element_type=jnp.float32)
                + bias_ref[...]).astype(o_ref.dtype)


@jax.jit
def _patch_embed_call(x_img, patch_w, patch_b, cls_token, pos_embed):
    B, Cin, Hs, Ws = x_img.shape
    E, _, ps, _ = patch_w.shape
    Hp, Wp = Hs // ps, Ws // ps
    P = Hp * Wp
    K = Cin * ps * ps
    N = P + 1

    # im2col for a stride==kernel_size Conv2d (pure layout plumbing outside the kernel).
    patches = x_img.reshape(B, Cin, Hp, ps, Wp, ps).transpose(0, 2, 4, 1, 3, 5)
    patches = patches.reshape(B, P, K)
    tokens = jnp.concatenate([jnp.zeros((B, 1, K), patches.dtype), patches], axis=1)

    w2 = patch_w.reshape(E, K).T                                    # (K, E)
    bias = jnp.concatenate(
        [cls_token[0] + pos_embed[0, :1],                           # cls row
         patch_b[None, :] + pos_embed[0, 1:]], axis=0)              # patch rows

    flops = 2 * B * N * K * E
    bytes_accessed = 4 * (tokens.size + w2.size + bias.size + B * N * E)
    return pl.pallas_call(
        _embed_kernel,
        out_shape=jax.ShapeDtypeStruct((B, N, E), x_img.dtype),
        grid=(B,),
        in_specs=[
            pl.BlockSpec((1, N, K), lambda b: (b, 0, 0)),
            pl.BlockSpec((K, E), lambda b: (0, 0)),
            pl.BlockSpec((N, E), lambda b: (0, 0)),
        ],
        out_specs=pl.BlockSpec((1, N, E), lambda b: (b, 0, 0)),
        compiler_params=pltpu.CompilerParams(dimension_semantics=("parallel",)),
        cost_estimate=pl.CostEstimate(flops=flops, transcendentals=0,
                                      bytes_accessed=bytes_accessed),
    )(tokens, w2, bias)


# ---------------------------------------------------------------------------
# Linear + ReLU kernel (the nn.Sequential inserted after block 10)
# ---------------------------------------------------------------------------
def _linear_relu_kernel(x_ref, w_ref, b_ref, o_ref):
    y = jnp.dot(x_ref[...], w_ref[...], preferred_element_type=jnp.float32) + b_ref[...]
    o_ref[...] = jnp.maximum(y, 0.0).astype(o_ref.dtype)


@jax.jit
def _linear_relu_call(x, w, b):
    B, N, Cin = x.shape
    Cout = w.shape[1]
    x2 = x.reshape(B * N, Cin)                  # pack rows -> larger MXU M dimension
    b2 = b.reshape(1, Cout)
    flops = 2 * B * N * Cin * Cout
    bytes_accessed = 4 * (x2.size + w.size + b2.size + B * N * Cout)
    y = pl.pallas_call(
        _linear_relu_kernel,
        out_shape=jax.ShapeDtypeStruct((B * N, Cout), x.dtype),
        grid=(1,),
        in_specs=[
            pl.BlockSpec((B * N, Cin), lambda i: (0, 0)),
            pl.BlockSpec((Cin, Cout), lambda i: (0, 0)),
            pl.BlockSpec((1, Cout), lambda i: (0, 0)),
        ],
        out_specs=pl.BlockSpec((B * N, Cout), lambda i: (0, 0)),
        compiler_params=pltpu.CompilerParams(dimension_semantics=("arbitrary",)),
        cost_estimate=pl.CostEstimate(flops=flops, transcendentals=0,
                                      bytes_accessed=bytes_accessed),
    )(x2, w, b2)
    return y.reshape(B, N, Cout)


# ---------------------------------------------------------------------------
# Full VisTransformer forward (Python loop over blocks; each block is fused)
# ---------------------------------------------------------------------------
def vis_transformer_forward(x_img, params, num_heads):
    x = _patch_embed_call(x_img, params["patch_w"], params["patch_b"],
                          params["cls_token"], params["pos_embed"])
    for kind, p in params["blocks"]:
        if kind == "vit":
            x = _vit_block_call(x, p, num_heads=num_heads)
        else:  # "proj": Linear + ReLU
            x = _linear_relu_call(x, p["w"], p["b"])
    return x


# ---------------------------------------------------------------------------
# Pure-JAX reference mirroring the PyTorch forward
# ---------------------------------------------------------------------------
def _layernorm_ref(x, g, b, eps=1e-6):
    mu = jnp.mean(x, axis=-1, keepdims=True)
    var = jnp.mean(jnp.square(x - mu), axis=-1, keepdims=True)
    return (x - mu) * jax.lax.rsqrt(var + eps) * g + b


def _attention_ref(x, p, num_heads):
    B, N, C = x.shape
    H, D = num_heads, C // num_heads
    scale = D ** (-0.5)
    qkv = x @ p["w_qkv"] + p["b_qkv"]
    qkv = qkv.reshape(B, N, 3, H, D).transpose(2, 0, 3, 1, 4)
    q, k, v = qkv[0], qkv[1], qkv[2]
    attn = jnp.einsum("bhnd,bhmd->bhnm", q, k) * scale
    attn = jax.nn.softmax(attn, axis=-1)
    o = jnp.einsum("bhnm,bhmd->bhnd", attn, v)
    o = o.transpose(0, 2, 1, 3).reshape(B, N, C)
    return o @ p["w_proj"] + p["b_proj"]


def _vit_block_ref(x, p, num_heads):
    x = x + _attention_ref(_layernorm_ref(x, p["ln1_g"], p["ln1_b"]), p, num_heads)
    y = _layernorm_ref(x, p["ln2_g"], p["ln2_b"])
    y = _gelu(y @ p["w_fc1"] + p["b_fc1"]) @ p["w_fc2"] + p["b_fc2"]
    return x + y


def vis_transformer_reference(x_img, params, num_heads):
    ps = params["patch_w"].shape[-1]
    y = jax.lax.conv_general_dilated(
        x_img, params["patch_w"], window_strides=(ps, ps), padding="VALID",
        dimension_numbers=("NCHW", "OIHW", "NCHW"))
    B, E, Hp, Wp = y.shape
    y = y.reshape(B, E, Hp * Wp).transpose(0, 2, 1) + params["patch_b"][None, None, :]
    cls = jnp.broadcast_to(params["cls_token"], (B, 1, E))
    x = jnp.concatenate([cls, y], axis=1) + params["pos_embed"]
    for kind, p in params["blocks"]:
        if kind == "vit":
            x = _vit_block_ref(x, p, num_heads)
        else:
            x = jnp.maximum(x @ p["w"] + p["b"], 0.0)
    return x


# ---------------------------------------------------------------------------
# Deterministic parameter init (PyTorch init values replaced with small randoms
# so the test is non-trivial; forward semantics are unchanged).
# ---------------------------------------------------------------------------
def init_vit_params(key, *, img_size, patch_size, in_chans, embed_dim, depth,
                    num_heads, mlp_ratio, new_embed_dim):
    del num_heads  # per-block head count is passed at call time
    n_patches = (img_size // patch_size) ** 2
    keys = iter(jax.random.split(key, 256))

    def rnd(shape, scale=0.06):
        return scale * jax.random.normal(next(keys), shape, dtype=jnp.float32)

    params = {
        "patch_w": rnd((embed_dim, in_chans, patch_size, patch_size)),
        "patch_b": rnd((embed_dim,), 0.02),
        "cls_token": rnd((1, 1, embed_dim), 0.1),
        "pos_embed": rnd((1, n_patches + 1, embed_dim), 0.1),
    }

    def make_block(dim):
        hidden = int(dim * mlp_ratio)
        return {
            "ln1_g": 1.0 + rnd((dim,), 0.1), "ln1_b": rnd((dim,), 0.05),
            "w_qkv": rnd((dim, 3 * dim)), "b_qkv": rnd((3 * dim,), 0.02),
            "w_proj": rnd((dim, dim)), "b_proj": rnd((dim,), 0.02),
            "ln2_g": 1.0 + rnd((dim,), 0.1), "ln2_b": rnd((dim,), 0.05),
            "w_fc1": rnd((dim, hidden)), "b_fc1": rnd((hidden,), 0.02),
            "w_fc2": rnd((hidden, dim)), "b_fc2": rnd((dim,), 0.02),
        }

    blocks = []
    for i in range(depth):
        if i < 10:
            blocks.append(("vit", make_block(embed_dim)))
        elif i == 10:
            blocks.append(("vit", make_block(embed_dim)))
            blocks.append(("proj", {"w": rnd((embed_dim, new_embed_dim)),
                                    "b": rnd((new_embed_dim,), 0.02)}))
        else:
            blocks.append(("vit", make_block(new_embed_dim)))
    params["blocks"] = blocks
    return params


if __name__ == "__main__":
    # Small config consistent with VisTransformer's forward (note: num_heads must
    # divide both embed_dim and new_embed_dim for the reshape in CustomAttention).
    B = 2
    img_size, patch_size, in_chans = 16, 8, 4
    embed_dim, new_embed_dim = 32, 48
    depth, num_heads, mlp_ratio = 12, 4, 4

    root = jax.random.PRNGKey(0)
    k_params, k_x = jax.random.split(root)
    params = init_vit_params(k_params, img_size=img_size, patch_size=patch_size,
                             in_chans=in_chans, embed_dim=embed_dim, depth=depth,
                             num_heads=num_heads, mlp_ratio=mlp_ratio,
                             new_embed_dim=new_embed_dim)
    x_img = jax.random.normal(k_x, (B, in_chans, img_size, img_size), dtype=jnp.float32)

    out = vis_transformer_forward(x_img, params, num_heads)
    out = jax.block_until_ready(out)

    ref = vis_transformer_reference(x_img, params, num_heads)
    ref = jax.block_until_ready(ref)

    n_tokens = (img_size // patch_size) ** 2 + 1
    assert out.shape == (B, n_tokens, new_embed_dim), out.shape
    max_err = float(jnp.max(jnp.abs(out - ref)))
    ref_mag = float(jnp.max(jnp.abs(ref)))
    assert max_err <= 1e-2 * ref_mag + 1e-3, f"mismatch vs reference: {max_err}"

    print("KERNEL_OK")
</pallas_src>

<mosaic_0001>
module attributes {stable_mosaic.version = 11 : i64} {
  func.func @_embed_kernel(%arg0: i32, %arg1: memref<1x5x256xf32, #tpu.memory_space<vmem>>, %arg2: memref<256x32xf32, #tpu.memory_space<vmem>>, %arg3: memref<5x32xf32, #tpu.memory_space<vmem>>, %arg4: memref<1x5x32xf32, #tpu.memory_space<vmem>>) attributes {dimension_semantics = [#tpu.dimension_semantics<parallel>], iteration_bounds = array<i64: 2>, scalar_prefetch = 0 : i64, scratch_operands = 0 : i64, tpu.core_type = #tpu.core_type<tc>, window_params = [{transform_indices = @transform_0, window_bounds = array<i64: 1, 5, 256>}, {pipeline_mode = #tpu.pipeline_mode<synchronous>, transform_indices = @transform_1, window_bounds = array<i64: 256, 32>}, {pipeline_mode = #tpu.pipeline_mode<synchronous>, transform_indices = @transform_2, window_bounds = array<i64: 5, 32>}, {transform_indices = @transform_3, window_bounds = array<i64: 1, 5, 32>}]} {
    %c0 = arith.constant 0 : index
    %c0_0 = arith.constant 0 : index
    %c0_1 = arith.constant 0 : index
    %0 = vector.load %arg1[%c0, %c0_0, %c0_1] : memref<1x5x256xf32, #tpu.memory_space<vmem>>, vector<1x5x256xf32>
    %1 = vector.shape_cast %0 : vector<1x5x256xf32> to vector<5x256xf32>
    %c0_2 = arith.constant 0 : index
    %c0_3 = arith.constant 0 : index
    %2 = vector.load %arg2[%c0_2, %c0_3] : memref<256x32xf32, #tpu.memory_space<vmem>>, vector<256x32xf32>
    %cst = arith.constant dense<0.000000e+00> : vector<5x32xf32>
    %3 = tpu.matmul %1, %2, %cst {dimension_numbers = #tpu.dot_dimension_numbers<[1], [0], [0], [1], [0, 0, 1, 1], [], []>} : vector<5x256xf32>, vector<256x32xf32>, vector<5x32xf32> -> vector<5x32xf32>
    %c0_4 = arith.constant 0 : index
    %c0_5 = arith.constant 0 : index
    %4 = vector.load %arg3[%c0_4, %c0_5] : memref<5x32xf32, #tpu.memory_space<vmem>>, vector<5x32xf32>
    %5 = arith.addf %3, %4 : vector<5x32xf32>
    %c0_6 = arith.constant 0 : index
    %c0_7 = arith.constant 0 : index
    %c0_8 = arith.constant 0 : index
    %6 = vector.load %arg4[%c0_6, %c0_7, %c0_8] : memref<1x5x32xf32, #tpu.memory_space<vmem>>, vector<1x5x32xf32>
    %7 = vector.shape_cast %6 : vector<1x5x32xf32> to vector<5x32xf32>
    %8 = vector.shape_cast %5 : vector<5x32xf32> to vector<1x5x32xf32>
    tpu.vector_store %arg4[%c0_6, %c0_7, %c0_8], %8 {strides = array<i32>} : memref<1x5x32xf32, #tpu.memory_space<vmem>>, vector<1x5x32xf32>,
    return
  }
  func.func @transform_0(%arg0: i32) -> (i32, i32, i32) {
    %c0_i32 = arith.constant 0 : i32
    %c0_i32_0 = arith.constant 0 : i32
    %c0_i32_1 = arith.constant 0 : i32
    return %arg0, %c0_i32, %c0_i32_0 : i32, i32, i32
  }
  func.func @transform_1(%arg0: i32) -> (i32, i32) {
    %c0_i32 = arith.constant 0 : i32
    %c0_i32_0 = arith.constant 0 : i32
    %c0_i32_1 = arith.constant 0 : i32
    return %c0_i32, %c0_i32_0 : i32, i32
  }
  func.func @transform_2(%arg0: i32) -> (i32, i32) {
    %c0_i32 = arith.constant 0 : i32
    %c0_i32_0 = arith.constant 0 : i32
    %c0_i32_1 = arith.constant 0 : i32
    return %c0_i32, %c0_i32_0 : i32, i32
  }
  func.func @transform_3(%arg0: i32) -> (i32, i32, i32) {
    %c0_i32 = arith.constant 0 : i32
    %c0_i32_0 = arith.constant 0 : i32
    %c0_i32_1 = arith.constant 0 : i32
    return %arg0, %c0_i32, %c0_i32_0 : i32, i32, i32
  }
}

</mosaic_0001>

<llo_original>
// kernel: _patch_embed_call.1
$region0: #{_patch_embed_call.1}
  #allocation0 [shape = 'u32[]', space=smem, size = 0x4, offset = 0x4, fixed_abs, tag = 'smem constant byte address 0x4 - core index']
  #allocation1 [shape = 'u32[144,128]{1,0:T(1,128)}', space=vmem, size = 0x12000, scoped, tag = 'internal scratch']
  %s0 = inlined_call_operand.vmem [shape: f32[2,5,256], index: 0, kind: input, shape index: {}]
  %s1 = inlined_call_operand.vmem [shape: f32[256,32], index: 1, kind: input, shape index: {}]
  %s2 = inlined_call_operand.vmem [shape: f32[5,32], index: 2, kind: input, shape index: {}]
  %s3 = inlined_call_operand.vmem [shape: f32[2,5,32], index: 3, kind: output, shape index: {}]
  %s4 = sld [smem:[#allocation0]]
  $region45: #{_patch_embed_call.1} parent=0
    _
  %s6 = ssub.s32 1, %s4
  %s7 = scalar_select 0, %s6, %s4
  loop: start=0, step=1, limit=4
  $region2: #{_patch_embed_call.1} parent=0 // loop_pre_header
    _
  $region3: #{_patch_embed_call.1} parent=0 // loop_header
    %s9 = sphi 0, %s13
    %p10 = scmp.ge.s32.totalorder %s9, 4
    %s19 = sphi 0, %s21
    %s22 = sphi 0, %s19
    %s23 = sphi 0, %s22
    %s39 = sphi 0, %s23
    %s43 = sphi 0, %s43
    %s45 = sphi 0, %s43
    %s46 = sphi 0, %s45
    %s60 = sphi 0, %s46
    %s64 = sphi 0, %s64
    %s66 = sphi 0, %s64
    %s67 = sphi 0, %s66
    %s81 = sphi 0, %s67
    %s87 = sphi 0, %s89
    %s90 = sphi 0, %s87
    %s91 = sphi 0, %s90
    %s107 = sphi 0, %s91
  $region4: #{_patch_embed_call.1} parent=0 // loop_header_branch
    %12 = sbr.rel (%p10) target = $region8
  $region5: #{_patch_embed_call.1} parent=0 // loop_body
    %s14 = ssub.s32 %s9, 1
    %s15 = ssub.s32 %s9, 2
    %s16 = sadd.s32 %s9, 1
    %s17 = ssub.s32 %s9, %s16
    %p18 = scmp.eq.s32.totalorder %s17, 0
    %s20 = sadd.s32 %s19, 1
    %s21 = scalar_select %p18, %s19, %s20
    %p24 = pneg %p18
    %p25 = scmp.eq.s32.totalorder %s9, 1
    %p26 = por %p24, %p25
    %p27 = scmp.ne.s32.totalorder %s19, %s22
    %p28 = scmp.eq.s32.totalorder %s9, 0
    %p29 = por %p27, %p28
    %p30 = scmp.ne.s32.totalorder %s19, %s22
    %p31 = scmp.eq.s32.totalorder %s14, 1
    %p32 = por %p30, %p31
    %p33 = scmp.ne.s32.totalorder %s22, %s23
    %p34 = scmp.eq.s32.totalorder %s14, 0
    %p35 = por %p33, %p34
    %p36 = scmp.ne.s32.totalorder %s22, %s23
    %p37 = scmp.eq.s32.totalorder %s15, 1
    %p38 = por %p36, %p37
    %p40 = scmp.ne.s32.totalorder %s23, %s39
    %p41 = scmp.eq.s32.totalorder %s15, 0
    %p42 = por %p40, %p41
    %s44 = sadd.s32 %s43, 1
    %p47 = scmp.eq.s32.totalorder %s9, 1
    %p48 = scmp.ne.s32.totalorder %s43, %s45
    %p49 = scmp.eq.s32.totalorder %s9, 0
    %p50 = por %p48, %p49
    %p51 = scmp.ne.s32.totalorder %s43, %s45
    %p52 = scmp.eq.s32.totalorder %s14, 1
    %p53 = por %p51, %p52
    %p54 = scmp.ne.s32.totalorder %s45, %s46
    %p55 = scmp.eq.s32.totalorder %s14, 0
    %p56 = por %p54, %p55
    %p57 = scmp.ne.s32.totalorder %s45, %s46
    %p58 = scmp.eq.s32.totalorder %s15, 1
    %p59 = por %p57, %p58
    %p61 = scmp.ne.s32.totalorder %s46, %s60
    %p62 = scmp.eq.s32.totalorder %s15, 0
    %p63 = por %p61, %p62
    %s65 = sadd.s32 %s64, 1
    %p68 = scmp.eq.s32.totalorder %s9, 1
    %p69 = scmp.ne.s32.totalorder %s64, %s66
    %p70 = scmp.eq.s32.totalorder %s9, 0
    %p71 = por %p69, %p70
    %p72 = scmp.ne.s32.totalorder %s64, %s66
    %p73 = scmp.eq.s32.totalorder %s14, 1
    %p74 = por %p72, %p73
    %p75 = scmp.ne.s32.totalorder %s66, %s67
    %p76 = scmp.eq.s32.totalorder %s14, 0
    %p77 = por %p75, %p76
    %p78 = scmp.ne.s32.totalorder %s66, %s67
    %p79 = scmp.eq.s32.totalorder %s15, 1
    %p80 = por %p78, %p79
    %p82 = scmp.ne.s32.totalorder %s67, %s81
    %p83 = scmp.eq.s32.totalorder %s15, 0
    %p84 = por %p82, %p83
    %s85 = ssub.s32 %s9, %s16
    %p86 = scmp.eq.s32.totalorder %s85, 0
    %s88 = sadd.s32 %s87, 1
    %s89 = scalar_select %p86, %s87, %s88
    %p92 = pneg %p86
    %p93 = scmp.eq.s32.totalorder %s9, 1
    %p94 = por %p92, %p93
    %p95 = scmp.ne.s32.totalorder %s87, %s90
    %p96 = scmp.eq.s32.totalorder %s9, 0
    %p97 = por %p95, %p96
    %p98 = scmp.ne.s32.totalorder %s87, %s90
    %p99 = scmp.eq.s32.totalorder %s14, 1
    %p100 = por %p98, %p99
    %p101 = scmp.ne.s32.totalorder %s90, %s91
    %p102 = scmp.eq.s32.totalorder %s14, 0
    %p103 = por %p101, %p102
    %p104 = scmp.ne.s32.totalorder %s90, %s91
    %p105 = scmp.eq.s32.totalorder %s15, 1
    %p106 = por %p104, %p105
    %p108 = scmp.ne.s32.totalorder %s91, %s107
    %p109 = scmp.eq.s32.totalorder %s15, 0
    %p110 = por %p108, %p109
    %p111 = scmp.le.s32.totalorder 1, %s9
    %p112 = scmp.lt.s32.totalorder %s9, 3
    %p113 = pnand %p111, %p112
    %p114 = pneg %p113
    // Predicated region
    $region9: #{_patch_embed_call.1} parent=5 // pred_check
      _
    $region10: #{_patch_embed_call.1} parent=5 // pred_check_branch
      %116 = sbr.rel (%p113) target = $region12
    $region11: #{_patch_embed_call.1} parent=5 // pred_region
      %s117 = ssub.s32 %s9, 1
      // Predicated region
      $region13: #{_patch_embed_call.1} parent=11 // pred_check
        %p118 = pneg %p56
      $region14: #{_patch_embed_call.1} parent=11 // pred_check_branch
        %120 = sbr.rel (%p118) target = $region16
      $region15: #{_patch_embed_call.1} parent=11 // pred_region
        _
      $region16: #{_patch_embed_call.1} parent=11 // pred_fallthru
        _
      // Predicated region
      $region17: #{_patch_embed_call.1} parent=11 // pred_check
        %p121 = pneg %p77
      $region18: #{_patch_embed_call.1} parent=11 // pred_check_branch
        %123 = sbr.rel (%p121) target = $region20
      $region19: #{_patch_embed_call.1} parent=11 // pred_region
        _
      $region20: #{_patch_embed_call.1} parent=11 // pred_fallthru
        _
    $region12: #{_patch_embed_call.1} parent=5 // pred_fallthru
      _
    %p124 = scmp.lt.s32.totalorder %s9, 2
    // Predicated region
    $region21: #{_patch_embed_call.1} parent=5 // pred_check
      %p125 = pneg %p124
    $region22: #{_patch_embed_call.1} parent=5 // pred_check_branch
      %127 = sbr.rel (%p125) target = $region24
    $region23: #{_patch_embed_call.1} parent=5 // pred_region
      // Predicated region
      $region25: #{_patch_embed_call.1} parent=23 // pred_check
        %p128 = pneg %p29
      $region26: #{_patch_embed_call.1} parent=23 // pred_check_branch
        %130 = sbr.rel (%p128) target = $region28
      $region27: #{_patch_embed_call.1} parent=23 // pred_region
        %p131 = scmp.lt.s32.totalorder %s9, 1
        %s132 = scalar_select %p131, %s9, 1
        %s133 = smul.addr %s132, 2
        %s134 = smul.addr %s133, 8
        %s135 = scalar_lea.vmem %s0, %s134
      $region28: #{_patch_embed_call.1} parent=23 // pred_fallthru
        _
    $region24: #{_patch_embed_call.1} parent=5 // pred_fallthru
      _
    %p136 = scmp.le.s32.totalorder 1, %s9
    %p137 = scmp.lt.s32.totalorder %s9, 3
    %p138 = pnand %p136, %p137
    %p139 = pneg %p138
    // Predicated region
    $region29: #{_patch_embed_call.1} parent=5 // pred_check
      _
    $region30: #{_patch_embed_call.1} parent=5 // pred_check_branch
      %141 = sbr.rel (%p138) target = $region32
    $region31: #{_patch_embed_call.1} parent=5 // pred_region
      %s142 = ssub.s32 %s9, 1
      %p143 = scmp.lt.s32.totalorder %s14, 1
      %s144 = scalar_select %p143, %s14, 1
      %s145 = smul.addr %s144, 2
      %s146 = smul.addr %s145, 8
      %s147 = scalar_lea.vmem %s0, %s146
      %p148 = pneg %p35
      %p149 = pneg %p32
      %p150 = pneg %p56
      %p151 = pneg %p53
      %p152 = pneg %p77
      %p153 = pneg %p74
      %p154 = pneg %p103
      %p155 = pneg %p100
      %p156 = scmp.lt.s32.totalorder %s14, 1
      %s157 = scalar_select %p156, %s14, 1
      %s158 = smul.addr %s157, 8
      %s159 = scalar_lea.vmem %s3, %s158
      %p160 = scmp.lt.s32.totalorder %s14, 1
      %s161 = scalar_select %p160, %s14, 1
      %s162 = smul.addr %s161, 2
      %s163 = smul.addr %s162, 8
      %s164 = scalar_lea.vmem %s0, %s163
      %p165 = scmp.lt.s32.totalorder %s14, 1
      %s166 = scalar_select %p165, %s14, 1
      %s167 = smul.addr %s166, 8
      %s168 = scalar_lea.vmem %s3, %s167
      %v169 = vld [vmem:[%s164] sm:$0x1f]
      %v170 = vld [vmem:[%s164 + $0x8] sm:$0x1f]
      %v171 = vld [vmem:[%s1] sm:$0xff]
      %v172 = vld [vmem:[%s1 + $0x8] sm:$0xff]
      %v173 = vld [vmem:[%s1 + $0x10] sm:$0xff]
      %v174 = vld [vmem:[%s1 + $0x18] sm:$0xff]
      %v175 = vld [vmem:[%s1 + $0x20] sm:$0xff]
      %v176 = vld [vmem:[%s1 + $0x28] sm:$0xff]
      %v177 = vld [vmem:[%s1 + $0x30] sm:$0xff]
      %v178 = vld [vmem:[%s1 + $0x38] sm:$0xff]
      %v179 = vld [vmem:[%s1 + $0x40] sm:$0xff]
      %v180 = vld [vmem:[%s1 + $0x48] sm:$0xff]
      %v181 = vld [vmem:[%s1 + $0x50] sm:$0xff]
      %v182 = vld [vmem:[%s1 + $0x58] sm:$0xff]
      %v183 = vld [vmem:[%s1 + $0x60] sm:$0xff]
      %v184 = vld [vmem:[%s1 + $0x68] sm:$0xff]
      %v185 = vld [vmem:[%s1 + $0x70] sm:$0xff]
      %v186 = vld [vmem:[%s1 + $0x78] sm:$0xff]
      %v187 = vld [vmem:[%s1 + $0x80] sm:$0xff]
      %v188 = vld [vmem:[%s1 + $0x88] sm:$0xff]
      %v189 = vld [vmem:[%s1 + $0x90] sm:$0xff]
      %v190 = vld [vmem:[%s1 + $0x98] sm:$0xff]
      %v191 = vld [vmem:[%s1 + $0xa0] sm:$0xff]
      %v192 = vld [vmem:[%s1 + $0xa8] sm:$0xff]
      %v193 = vld [vmem:[%s1 + $0xb0] sm:$0xff]
      %v194 = vld [vmem:[%s1 + $0xb8] sm:$0xff]
      %v195 = vld [vmem:[%s1 + $0xc0] sm:$0xff]
      %v196 = vld [vmem:[%s1 + $0xc8] sm:$0xff]
      %v197 = vld [vmem:[%s1 + $0xd0] sm:$0xff]
      %v198 = vld [vmem:[%s1 + $0xd8] sm:$0xff]
      %v199 = vld [vmem:[%s1 + $0xe0] sm:$0xff]
      %v200 = vld [vmem:[%s1 + $0xe8] sm:$0xff]
      %v201 = vld [vmem:[%s1 + $0xf0] sm:$0xff]
      %v202 = vld [vmem:[%s1 + $0xf8] sm:$0xff]
      %v203 = vld [vmem:[%s2] sm:$0x1f]
      %204 = vmatprep.subr.mxu0 0.0
      %205 = vmatpush1.msra.mxu0 %v171
      %206 = vmatprep.subr.mxu0 0.0
      %207 = vmatpush1.msra.mxu0 %v172
      %208 = vmatprep.subr.mxu0 0.0
      %209 = vmatpush1.msra.mxu0 %v173
      %210 = vmatprep.subr.mxu0 0.0
      %211 = vmatpush1.msra.mxu0 %v174
      %212 = vmatprep.subr.mxu0 0.0
      %213 = vmatpush1.msra.mxu0 %v175
      %214 = vmatprep.subr.mxu0 0.0
      %215 = vmatpush1.msra.mxu0 %v176
      %216 = vmatprep.subr.mxu0 0.0
      %217 = vmatpush1.msra.mxu0 %v177
      %218 = vmatprep.subr.mxu0 0.0
      %219 = vmatpush1.msra.mxu0 %v178
      %220 = vmatprep.subr.mxu0 0.0
      %221 = vmatpush1.msra.mxu0 %v179
      %222 = vmatprep.subr.mxu0 0.0
      %223 = vmatpush1.msra.mxu0 %v180
      %224 = vmatprep.subr.mxu0 0.0
      %225 = vmatpush1.msra.mxu0 %v181
      %226 = vmatprep.subr.mxu0 0.0
      %227 = vmatpush1.msra.mxu0 %v182
      %228 = vmatprep.subr.mxu0 0.0
      %229 = vmatpush1.msra.mxu0 %v183
      %230 = vmatprep.subr.mxu0 0.0
      %231 = vmatpush1.msra.mxu0 %v184
      %232 = vmatprep.subr.mxu0 0.0
      %233 = vmatpush1.msra.mxu0 %v185
      %234 = vmatprep.subr.mxu0 0.0
      %235 = vmatpush1.msra.mxu0 %v186
      %236 = vmatprep.subr.mxu0 0.0
      %237 = vmatpush1.msra.mxu0 %v187
      %238 = vmatprep.subr.mxu0 0.0
      %239 = vmatpush1.msra.mxu0 %v188
      %240 = vmatprep.subr.mxu0 0.0
      %241 = vmatpush1.msra.mxu0 %v189
      %242 = vmatprep.subr.mxu0 0.0
      %243 = vmatpush1.msra.mxu0 %v190
      %244 = vmatprep.subr.mxu0 0.0
      %245 = vmatpush1.msra.mxu0 %v191
      %246 = vmatprep.subr.mxu0 0.0
      %247 = vmatpush1.msra.mxu0 %v192
      %248 = vmatprep.subr.mxu0 0.0
      %249 = vmatpush1.msra.mxu0 %v193
      %250 = vmatprep.subr.mxu0 0.0
      %251 = vmatpush1.msra.mxu0 %v194
      %252 = vmatprep.subr.mxu0 0.0
      %253 = vmatpush1.msra.mxu0 %v195
      %254 = vmatprep.subr.mxu0 0.0
      %255 = vmatpush1.msra.mxu0 %v196
      %256 = vmatprep.subr.mxu0 0.0
      %257 = vmatpush1.msra.mxu0 %v197
      %258 = vmatprep.subr.mxu0 0.0
      %259 = vmatpush1.msra.mxu0 %v198
      %260 = vmatprep.subr.mxu0 0.0
      %261 = vmatpush1.msra.mxu0 %v199
      %262 = vmatprep.subr.mxu0 0.0
      %263 = vmatpush1.msra.mxu0 %v200
      %264 = vmatprep.subr.mxu0 0.0
      %265 = vmatpush1.msra.mxu0 %v201
      %266 = vmatprep.subr.mxu0 0.0
      %267 = vmatpush1.msra.mxu0 %v202
      %268 = vmatprep.mubr.f32.mxu0 %v170
      %269 = vmatmul.mubr.f32.gmra.mrb[0].mxu0 %v169
      %v270 = vpop.f32.mrb[0].mxu0
      %v271 = vadd.f32 %v203, %v270
      %v272 = vpop.f32.mrb[0].mxu0
      %273 = vdwg.mxu0
      %vm274 = vcmask 258048
      %275 = vst.msk [vmem:[%s168] sm:$0x1f] %vm274, %v271
      %p276 = scmp.lt.s32.totalorder %s14, 1
      %s277 = scalar_select %p276, %s14, 1
      %s278 = smul.addr %s277, 8
      %s279 = scalar_lea.vmem %s3, %s278
      // Predicated region
      $region33: #{_patch_embed_call.1} parent=31 // pred_check
        %p280 = pneg %p100
      $region34: #{_patch_embed_call.1} parent=31 // pred_check_branch
        %282 = sbr.rel (%p280) target = $region36
      $region35: #{_patch_embed_call.1} parent=31 // pred_region
        _
      $region36: #{_patch_embed_call.1} parent=31 // pred_fallthru
        _
    $region32: #{_patch_embed_call.1} parent=5 // pred_fallthru
      _
    %p283 = scmp.le.s32.totalorder 2, %s9
    // Predicated region
    $region37: #{_patch_embed_call.1} parent=5 // pred_check
      %p284 = pneg %p283
    $region38: #{_patch_embed_call.1} parent=5 // pred_check_branch
      %286 = sbr.rel (%p284) target = $region40
    $region39: #{_patch_embed_call.1} parent=5 // pred_region
      %s287 = ssub.s32 %s9, 2
      // Predicated region
      $region41: #{_patch_embed_call.1} parent=39 // pred_check
        %p288 = pneg %p106
      $region42: #{_patch_embed_call.1} parent=39 // pred_check_branch
        %290 = sbr.rel (%p288) target = $region44
      $region43: #{_patch_embed_call.1} parent=39 // pred_region
        %p291 = scmp.lt.s32.totalorder %s15, 1
        %s292 = scalar_select %p291, %s15, 1
        %s293 = smul.addr %s292, 8
        %s294 = scalar_lea.vmem %s3, %s293
      $region44: #{_patch_embed_call.1} parent=39 // pred_fallthru
        _
    $region40: #{_patch_embed_call.1} parent=5 // pred_fallthru
      _
  $region6: #{_patch_embed_call.1} parent=0 // loop_footer
    %s13 = sadd.s32 1, %s9
  $region7: #{_patch_embed_call.1} parent=0 // loop_footer_branch
    %8 = sbr.rel target = $region3
  $region8: #{_patch_embed_call.1} parent=0 // loop_exit
    _

</llo_original>
